<compile_context>
chip_gen: v5e
topology: v5e:2x2
jax: 0.10.0
libtpu: 0.0.40
codegen_flags: <defaults>
</compile_context>

<pallas_src>
import functools

import jax
import jax.numpy as jnp
from jax import lax
from jax.experimental import pallas as pl
from jax.experimental.pallas import tpu as pltpu


def linear_kernel(x_ref, w_ref, b_ref, o_ref):
    """y = x @ w.T + b, with w kept in native (out_features, in_features) layout."""
    x = x_ref[...]        # (tb, in_f)
    w = w_ref[...]        # (out_f, in_f)  -- native PyTorch layout
    b = b_ref[...]        # (1, out_f)
    # Contract x dim 1 against w dim 1 (== x @ w.T) directly on the MXU;
    # f32 accumulation.
    acc = lax.dot_general(
        x, w,
        dimension_numbers=(((1,), (1,)), ((), ())),
        preferred_element_type=jnp.float32,
    )
    o_ref[...] = (acc + b).astype(o_ref.dtype)


@functools.partial(jax.jit, static_argnames=("batch_tile",))
def linear_pallas(x, weight, bias, *, batch_tile=512):
    """Equivalent of torch.nn.Linear(100, 10): y = x @ weight.T + bias.

    x:      (B, 100)  float32
    weight: (10, 100) float32  (PyTorch layout: (out_features, in_features))
    bias:   (10,)     float32
    """
    B, in_f = x.shape
    out_f = weight.shape[0]
    b2 = bias.reshape(1, out_f)   # free under jit (metadata-only reshape)

    flops = 2 * B * in_f * out_f
    bytes_accessed = 4 * (B * in_f + out_f * in_f + out_f + B * out_f)
    cost = pl.CostEstimate(
        flops=flops, transcendentals=0, bytes_accessed=bytes_accessed)

    # Small / irregular batches: single block, everything resident in VMEM.
    if B <= batch_tile or (B % batch_tile) != 0:
        return pl.pallas_call(
            linear_kernel,
            out_shape=jax.ShapeDtypeStruct((B, out_f), x.dtype),
            in_specs=[
                pl.BlockSpec(memory_space=pltpu.MemorySpace.VMEM),  # x
                pl.BlockSpec(memory_space=pltpu.MemorySpace.VMEM),  # weight
                pl.BlockSpec(memory_space=pltpu.MemorySpace.VMEM),  # bias
            ],
            out_specs=pl.BlockSpec(memory_space=pltpu.MemorySpace.VMEM),
            cost_estimate=cost,
        )(x, weight, b2)

    # Large batches: stream x / y batch tiles, keep weight & bias resident.
    tb = batch_tile
    grid = (B // tb,)
    return pl.pallas_call(
        linear_kernel,
        out_shape=jax.ShapeDtypeStruct((B, out_f), x.dtype),
        grid_spec=pltpu.PrefetchScalarGridSpec(
            num_scalar_prefetch=0,
            grid=grid,
            in_specs=[
                pl.BlockSpec((tb, in_f), lambda i: (i, 0)),      # x tile
                pl.BlockSpec((out_f, in_f), lambda i: (0, 0)),   # weight (resident)
                pl.BlockSpec((1, out_f), lambda i: (0, 0)),      # bias (resident)
            ],
            out_specs=pl.BlockSpec((tb, out_f), lambda i: (i, 0)),
        ),
        compiler_params=pltpu.CompilerParams(
            dimension_semantics=("parallel",)),
        cost_estimate=cost,
    )(x, weight, b2)


if __name__ == "__main__":
    key = jax.random.PRNGKey(0)
    kx, kw, kb = jax.random.split(key, 3)

    B, IN, OUT = 8, 100, 10
    x = jax.random.normal(kx, (B, IN), dtype=jnp.float32)
    # Deterministic parameter init (mimicking nn.Linear's uniform init range).
    bound = 1.0 / jnp.sqrt(IN)
    weight = jax.random.uniform(kw, (OUT, IN), minval=-bound, maxval=bound,
                                dtype=jnp.float32)
    bias = jax.random.uniform(kb, (OUT,), minval=-bound, maxval=bound,
                              dtype=jnp.float32)

    y = linear_pallas(x, weight, bias)
    jax.block_until_ready(y)

    # Cross-check against plain JAX reference.
    y_ref = x @ weight.T + bias
    assert y.shape == (B, OUT)
    assert jnp.allclose(y, y_ref, atol=1e-5, rtol=1e-5)

    print("KERNEL_OK")
</pallas_src>

<mosaic_0001>
module attributes {stable_mosaic.version = 11 : i64} {
  func.func @linear_kernel(%arg0: memref<8x100xf32, #tpu.memory_space<vmem>>, %arg1: memref<10x100xf32, #tpu.memory_space<vmem>>, %arg2: memref<1x10xf32, #tpu.memory_space<vmem>>, %arg3: memref<8x10xf32, #tpu.memory_space<vmem>>) attributes {dimension_semantics = [], scalar_prefetch = 0 : i64, scratch_operands = 0 : i64, tpu.core_type = #tpu.core_type<tc>} {
    %c0 = arith.constant 0 : index
    %c0_0 = arith.constant 0 : index
    %0 = vector.load %arg0[%c0, %c0_0] : memref<8x100xf32, #tpu.memory_space<vmem>>, vector<8x100xf32>
    %c0_1 = arith.constant 0 : index
    %c0_2 = arith.constant 0 : index
    %1 = vector.load %arg1[%c0_1, %c0_2] : memref<10x100xf32, #tpu.memory_space<vmem>>, vector<10x100xf32>
    %c0_3 = arith.constant 0 : index
    %c0_4 = arith.constant 0 : index
    %2 = vector.load %arg2[%c0_3, %c0_4] : memref<1x10xf32, #tpu.memory_space<vmem>>, vector<1x10xf32>
    %cst = arith.constant dense<0.000000e+00> : vector<8x10xf32>
    %3 = tpu.matmul %0, %1, %cst {dimension_numbers = #tpu.dot_dimension_numbers<[1], [1], [0], [0], [0, 0, 1, 0], [], []>} : vector<8x100xf32>, vector<10x100xf32>, vector<8x10xf32> -> vector<8x10xf32>
    %4 = vector.broadcast %2 : vector<1x10xf32> to vector<8x10xf32>
    %5 = arith.addf %3, %4 : vector<8x10xf32>
    %c0_5 = arith.constant 0 : index
    %c0_6 = arith.constant 0 : index
    %6 = vector.load %arg3[%c0_5, %c0_6] : memref<8x10xf32, #tpu.memory_space<vmem>>, vector<8x10xf32>
    tpu.vector_store %arg3[%c0_5, %c0_6], %5 {strides = array<i32>} : memref<8x10xf32, #tpu.memory_space<vmem>>, vector<8x10xf32>,
    return
  }
}

</mosaic_0001>

<llo_original>
// kernel: linear_pallas.1
$region0: #{linear_pallas.1}
  #allocation0 [shape = 'u32[]', space=smem, size = 0x4, offset = 0x4, fixed_abs, tag = 'smem constant byte address 0x4 - core index']
  #allocation1 [shape = 'u32[72,128]{1,0:T(1,128)}', space=vmem, size = 0x9000, scoped, tag = 'internal scratch']
  %s0 = inlined_call_operand.hbm [shape: f32[8,100], index: 0, kind: input, shape index: {}]
  %s1 = inlined_call_operand.hbm [shape: f32[10,100], index: 1, kind: input, shape index: {}]
  %s2 = inlined_call_operand.vmem [shape: f32[1,10], index: 2, kind: input, shape index: {}]
  %s3 = inlined_call_operand.hbm [shape: f32[8,10], index: 3, kind: output, shape index: {}]
  %s4 = sld [smem:[#allocation0]]
  $region30: #{linear_pallas.1} parent=0
    _
  %s6 = ssub.s32 1, %s4
  %s7 = scalar_select 0, %s6, %s4
  $region1: #{linear_pallas.1} parent=0
    #allocation2 [shape = 'u8[4096]{0}', space=vmem, size = 0x1000, scoped, tag = 'input window, operand 0, single buffered']
    #allocation3 [shape = 's32[1]{0}', space=sflag, size = 0x4, scoped, tag = 'scoped memory for linear_pallas.1']
    #allocation4 [shape = 's32[1]{0}', space=sflag, size = 0x4, scoped, tag = 'scoped memory for linear_pallas.1']
    #allocation5 [shape = 'u8[8192]{0}', space=vmem, size = 0x2000, scoped, tag = 'input window, operand 1, single buffered']
    #allocation6 [shape = 's32[1]{0}', space=sflag, size = 0x4, scoped, tag = 'scoped memory for linear_pallas.1']
    #allocation7 [shape = 'u8[4096]{0}', space=vmem, size = 0x1000, scoped, tag = 'output window, operand 0, single buffered']
    %8 = vsyncpa [#allocation3], 0
    %9 = vsyncpa [#allocation6], 0
    %10 = vsyncpa [#allocation4], 0
    // Predicated region
    $region2: #{linear_pallas.1} parent=1 // pred_check
      _
    $region3: #{linear_pallas.1} parent=1 // pred_check_branch
      %12 = sbr.rel (0) target = $region5
    $region4: #{linear_pallas.1} parent=1 // pred_region
      %14 = vsyncadd [#allocation3], 0
      %s16 = sshll.u32 %s0, 4
      %s17 = int_to_ptr.hbm [resolvable:$true] %s16
      %s18 = sshll.u32 [#allocation2], 4
      %s19 = int_to_ptr.vmem [resolvable:$true] %s18
      %21 = dma.hbm_to_vmem [thread:$0]  %s17, 128, %s19, [#allocation3]
    $region5: #{linear_pallas.1} parent=1 // pred_fallthru
      _
    // Predicated region
    $region6: #{linear_pallas.1} parent=1 // pred_check
      _
    $region7: #{linear_pallas.1} parent=1 // pred_check_branch
      %23 = sbr.rel (0) target = $region9
    $region8: #{linear_pallas.1} parent=1 // pred_region
      %25 = vsyncadd [#allocation6], 0
      %s26 = sshll.u32 %s1, 4
      %s27 = int_to_ptr.hbm [resolvable:$true] %s26
      %s28 = sshll.u32 [#allocation5], 4
      %s29 = int_to_ptr.vmem [resolvable:$true] %s28
      %34 = dma.hbm_to_vmem [thread:$0]  %s27, 256, %s29, [#allocation6], 128, 128, 8
    $region9: #{linear_pallas.1} parent=1 // pred_fallthru
      _
    // Predicated region
    $region10: #{linear_pallas.1} parent=1 // pred_check
      _
    $region11: #{linear_pallas.1} parent=1 // pred_check_branch
      %36 = sbr.rel (0) target = $region13
    $region12: #{linear_pallas.1} parent=1 // pred_region
      _
    $region13: #{linear_pallas.1} parent=1 // pred_fallthru
      _
    // Predicated region
    $region14: #{linear_pallas.1} parent=1 // pred_check
      _
    $region15: #{linear_pallas.1} parent=1 // pred_check_branch
      %38 = sbr.rel (0) target = $region17
    $region16: #{linear_pallas.1} parent=1 // pred_region
      %40 = dma.done [#allocation3], 128
    $region17: #{linear_pallas.1} parent=1 // pred_fallthru
      _
    // Predicated region
    $region18: #{linear_pallas.1} parent=1 // pred_check
      _
    $region19: #{linear_pallas.1} parent=1 // pred_check_branch
      %42 = sbr.rel (0) target = $region21
    $region20: #{linear_pallas.1} parent=1 // pred_region
      %44 = dma.done [#allocation6], 256
    $region21: #{linear_pallas.1} parent=1 // pred_fallthru
      _
    %v45 = vld [vmem:[#allocation2] sm:$0xff]
    %v46 = vld [vmem:[#allocation5] sm:$0xff]
    %v47 = vld [vmem:[#allocation5 + $0x8] sm:$0x3]
    %v48 = vld [vmem:[%s2] sm:$0x1]
    %v50 = vperm.slane %v48, 0
    %vm52 = vcmask 818176
    %v54 = vsel %vm52, %v45, 0
    %v57 = vsel %vm52, %v46, 0
    %v60 = vsel %vm52, %v47, 0
    %62 = vmatpush.xpose.msra.mxu0 0.0
    %63 = vmatpush.xpose.msra.mxu0 0.0
    %64 = vmatpush.xpose.msra.mxu0 0.0
    %65 = vmatpush.xpose.msra.mxu0 0.0
    %66 = vmatpush.xpose.msra.mxu0 0.0
    %67 = vmatpush.xpose.msra.mxu0 0.0
    %68 = vmatpush.xpose.msra.mxu0 0.0
    %69 = vmatpush.xpose.msra.mxu0 0.0
    %70 = vmatpush.xpose.msra.mxu0 0.0
    %71 = vmatpush.xpose.msra.mxu0 0.0
    %72 = vmatpush.xpose.msra.mxu0 0.0
    %73 = vmatpush.xpose.msra.mxu0 0.0
    %74 = vmatpush.xpose.msra.mxu0 0.0
    %75 = vmatpush.xpose.msra.mxu0 0.0
    %76 = vmatpush.xpose.msra.mxu0 %v60
    %77 = vmatpush.xpose.msra.mxu0 %v57
    %78 = vmatmul.f32.gmra.mxu0 %v54
    %v79 = vpop.f32.mrf.mxu0
    %v80 = vadd.f32 %v50, %v79
    %81 = vdwg.mxu0
    %vm82 = vcmask 80896
    %83 = vst.msk [vmem:[#allocation7] sm:$0xff] %vm82, %v80
    // Predicated region
    $region22: #{linear_pallas.1} parent=1 // pred_check
      _
    $region23: #{linear_pallas.1} parent=1 // pred_check_branch
      %85 = sbr.rel (0) target = $region25
    $region24: #{linear_pallas.1} parent=1 // pred_region
      %87 = vsyncadd [#allocation4], 0
      %s89 = sshll.u32 [#allocation7], 4
      %s90 = int_to_ptr.vmem [resolvable:$true] %s89
      %s91 = sshll.u32 %s3, 4
      %s92 = int_to_ptr.hbm [resolvable:$true] %s91
      %94 = dma.vmem_to_hbm [thread:$0]  %s90, 128, %s92, [#allocation4]
    $region25: #{linear_pallas.1} parent=1 // pred_fallthru
      _
    // Predicated region
    $region26: #{linear_pallas.1} parent=1 // pred_check
      _
    $region27: #{linear_pallas.1} parent=1 // pred_check_branch
      %96 = sbr.rel (0) target = $region29
    $region28: #{linear_pallas.1} parent=1 // pred_region
      %98 = dma.done [#allocation4], 128
    $region29: #{linear_pallas.1} parent=1 // pred_fallthru
      _
    %99 = vsyncpa [#allocation3], 1
    %100 = vsyncpa [#allocation6], 1
    %101 = vsyncpa [#allocation4], 1

</llo_original>
